<compile_context>
chip_gen: v7x
topology: tpu7x:2x2x1
jax: 0.10.0
libtpu: 0.0.40
codegen_flags: <defaults>
</compile_context>

<pallas_src>
import functools
import math

import numpy as np
import jax
import jax.numpy as jnp
from jax.experimental import pallas as pl
from jax.experimental.pallas import tpu as pltpu


def _adaptive_pool_matrix(H, W, P, n_pad=None):
    """A (P*P, n_pad) such that A @ x_flat == adaptive_avg_pool2d(x, P) per channel.

    Columns >= H*W (token padding) are zero, so padded tokens contribute nothing.
    """
    N = H * W
    n_pad = N if n_pad is None else n_pad
    A = np.zeros((P * P, n_pad), dtype=np.float32)
    for i in range(P):
        r0 = (i * H) // P
        r1 = -(-((i + 1) * H) // P)  # ceil
        for j in range(P):
            c0 = (j * W) // P
            c1 = -(-((j + 1) * W) // P)
            cnt = float((r1 - r0) * (c1 - c0))
            for r in range(r0, r1):
                for c in range(c0, c1):
                    A[i * P + j, r * W + c] = 1.0 / cnt
    return A


def _round_up(n, m):
    return ((n + m - 1) // m) * m


def _pick_tile(n, align, max_tile):
    """Largest divisor of n that is a multiple of `align` and <= max_tile, else n."""
    best = None
    for t in range(align, min(n, max_tile) + 1, align):
        if n % t == 0:
            best = t
    return best if best is not None else n


def _vmem_capacity_bytes():
    try:
        return int(pltpu.get_tpu_info().vmem_capacity_bytes)
    except Exception:
        return 64 << 20  # conservative (v7x per-TC size)


def kv_kernel(x_ref, A_ref, wsr_ref, bsr_ref, g_ref, beta_ref, wkv_ref,
              kv_ref, pooled_acc, *, eps):
    n = pl.program_id(1)

    @pl.when(n == 0)
    def _():
        pooled_acc[...] = jnp.zeros_like(pooled_acc)

    # adaptive_avg_pool2d as a matmul, accumulated over N tiles. A is kept in
    # f32 so the 1/cnt pooling weights are exact; x tile is upcast in-kernel
    # (the pooling matmul is HBM-bound, not MXU-bound).
    pooled_acc[...] += jnp.dot(A_ref[...], x_ref[0].astype(jnp.float32),
                               preferred_element_type=jnp.float32)

    @pl.when(n == pl.num_programs(1) - 1)
    def _():
        # NOTE: wsr/wkv/bsr/gamma/beta are only needed in this epilogue; their
        # index maps are constant so they are never re-fetched across steps.
        # 1x1 conv (C -> C) with bias.
        t = jnp.dot(pooled_acc[...].astype(wsr_ref.dtype), wsr_ref[...],
                    preferred_element_type=jnp.float32) + bsr_ref[...]
        # LayerNorm over channels (f32).
        mu = jnp.mean(t, axis=-1, keepdims=True)
        var = jnp.mean((t - mu) ** 2, axis=-1, keepdims=True)
        t = (t - mu) * jax.lax.rsqrt(var + eps) * g_ref[...] + beta_ref[...]
        # Exact erf GELU (matches nn.GELU default).
        t = 0.5 * t * (1.0 + jax.lax.erf(t * 0.7071067811865476))
        # Fused kv projection: one (M, C) x (C, 2C) matmul, then ONE lane-dense
        # store of the full (M, 2C) slab (per-head split happens on the read
        # side in attn_kernel).
        kv = jnp.dot(t.astype(wkv_ref.dtype), wkv_ref[...],
                     preferred_element_type=jnp.float32)
        kv_ref[0] = kv.astype(kv_ref.dtype)


def attn_kernel(x_ref, kv_ref, wq_ref, wp_ref, bp_ref, o_ref, oacc_ref,
                *, num_heads, head_dim):
    cdt = kv_ref.dtype                                              # bf16
    C = num_heads * head_dim
    x = x_ref[0]                                                    # (TQ, C) bf16
    # q projection; attention scale is pre-folded into Wq.
    q = jnp.dot(x, wq_ref[...], preferred_element_type=jnp.float32).astype(cdt)

    kv = kv_ref[0]                                                  # (M, 2C) lane-dense

    # Per-head attention. Scores are computed in the transposed (M, TQ) layout:
    # TQ (128..512) sits on lanes so exp / max / sum run on dense vregs instead
    # of M (16..49) padded up to 128 lanes. Each head's intermediates die at the
    # end of its iteration; results are merged by static lane-slice stores into
    # a (TQ, C) VMEM scratch (no jnp.stack / jnp.concatenate relayout copies).
    for h in range(num_heads):
        lo = h * head_dim
        qh = q[:, lo:lo + head_dim]                                 # (TQ, hd)
        kh = kv[:, lo:lo + head_dim]                                # (M, hd)
        vh = kv[:, C + lo:C + lo + head_dim]                        # (M, hd)
        s = jnp.einsum("md,qd->mq", kh, qh,
                       preferred_element_type=jnp.float32)          # (M, TQ)
        s = s - jnp.max(s, axis=0, keepdims=True)
        p = jnp.exp(s)
        p = p * pl.reciprocal(jnp.sum(p, axis=0, keepdims=True), approx=True)
        oh = jnp.einsum("mq,md->qd", p.astype(cdt), vh,
                        preferred_element_type=jnp.float32)          # (TQ, hd)
        oacc_ref[:, lo:lo + head_dim] = oh.astype(cdt)

    # Merged heads -> single full-width output projection.
    out = jnp.dot(oacc_ref[...], wp_ref[...],
                  preferred_element_type=jnp.float32) + bp_ref[...]
    o_ref[0] = out.astype(o_ref.dtype)
    # TODO(synk): attn_drop / proj_drop are identity (p=0.0 / eval mode), not implemented.


def attention_super_forward(x, H, W, params, *, num_heads, pooling_dim,
                            tq=None, out_dtype=None):
    B, N, C = x.shape
    assert N == H * W and C % num_heads == 0
    head_dim = C // num_heads
    scale = head_dim ** (-0.5)            # == set_sample_config scale
    M = pooling_dim * pooling_dim
    eps = 1e-5
    bf16 = jnp.bfloat16
    out_dtype = x.dtype if out_dtype is None else out_dtype

    # VMEM-capacity-aware tile caps (v6e/v5e: 128 MiB -> bigger tiles; v7x: 64 MiB).
    vmem_cap = _vmem_capacity_bytes()
    big_vmem = vmem_cap >= (96 << 20)
    tn_cap = 1024 if big_vmem else 512
    tq_cap = 512 if big_vmem else 256

    # Pad the token axis to a multiple of 128 so both kernels keep real tiling
    # and pipelining even for N like 196 / 3136. Zero padding is exact: A gets
    # zero columns, and padded query rows are sliced off the output.
    N_pad = _round_up(N, 128)
    tn = _pick_tile(N_pad, 128, tn_cap)
    if tq is None:
        tq = _pick_tile(N_pad, 8, tq_cap)
    assert N_pad % tq == 0 and tq % 8 == 0

    # Parameter prep: bf16 matmul operands, f32 pooling matrix / bias / LN params.
    A = jnp.asarray(_adaptive_pool_matrix(H, W, pooling_dim, n_pad=N_pad))    # (M, Np) f32
    wq_t = (params["wq"].T * scale).astype(bf16)                              # (C, C), scale folded
    wkv_t = params["wkv"].T.astype(bf16)                                      # (C, 2C)
    wsr_t = params["wsr"].reshape(C, C).T.astype(bf16)                        # (C, C)
    bsr = params["bsr"].reshape(1, C).astype(jnp.float32)
    gamma = params["ln_w"].reshape(1, C).astype(jnp.float32)
    beta = params["ln_b"].reshape(1, C).astype(jnp.float32)
    wp_t = params["wproj"].T.astype(bf16)                                     # (C, C)
    bp = params["bproj"].reshape(1, C).astype(jnp.float32)

    x_bf = x.astype(bf16)
    if N_pad != N:
        x_bf = jnp.pad(x_bf, ((0, 0), (0, N_pad - N), (0, 0)))

    # Right-sized VMEM limit: actual double-buffered footprint + headroom,
    # capped at ~half the physical per-core VMEM (item 3 of the review).
    need_kv = (2 * tn * C * 2            # x tile (bf16, double buffered)
               + 2 * M * tn * 4          # A tile (f32)
               + 2 * C * C * 2           # Wsr^T
               + 2 * C * 2 * C * 2       # Wkv^T
               + 2 * 3 * C * 4           # bsr / gamma / beta
               + 2 * M * 2 * C * 2       # kv out
               + M * C * 4)              # pooled f32 scratch
    need_at = (2 * tq * C * 2            # x tile
               + 2 * M * 2 * C * 2       # kv
               + 2 * 2 * C * C * 2       # Wq^T + Wproj^T
               + 2 * C * 4               # bias
               + 2 * tq * C * jnp.dtype(out_dtype).itemsize   # output tile
               + tq * C * 2)             # merged-heads scratch
    need = max(need_kv, need_at)
    vmem_limit = int(min(max(need + (8 << 20), 24 << 20),
                         max(vmem_cap // 2, need + (4 << 20))))

    # ---- kernel 1: pool -> 1x1 conv -> LN -> GELU -> fused kv (lane-dense out) ----
    # NOTE(v7x megacore): only B is a parallel axis here (N is a reduction); the
    # kernel is small, so a single-TC run at B=1 is acceptable.
    kv_kern = functools.partial(kv_kernel, eps=eps)
    kv = pl.pallas_call(
        kv_kern,
        out_shape=jax.ShapeDtypeStruct((B, M, 2 * C), bf16),
        grid_spec=pltpu.PrefetchScalarGridSpec(
            num_scalar_prefetch=0,
            grid=(B, N_pad // tn),
            in_specs=[
                pl.BlockSpec((1, tn, C), lambda b, n: (b, n, 0)),     # x
                pl.BlockSpec((M, tn), lambda b, n: (0, n)),           # A_pool (f32)
                pl.BlockSpec((C, C), lambda b, n: (0, 0)),            # Wsr^T
                pl.BlockSpec((1, C), lambda b, n: (0, 0)),            # b_sr
                pl.BlockSpec((1, C), lambda b, n: (0, 0)),            # ln gamma
                pl.BlockSpec((1, C), lambda b, n: (0, 0)),            # ln beta
                pl.BlockSpec((C, 2 * C), lambda b, n: (0, 0)),        # Wkv^T
            ],
            out_specs=pl.BlockSpec((1, M, 2 * C), lambda b, n: (b, 0, 0)),
            scratch_shapes=[pltpu.VMEM((M, C), jnp.float32)],
        ),
        compiler_params=pltpu.CompilerParams(
            dimension_semantics=("parallel", "arbitrary"),
            vmem_limit_bytes=vmem_limit),
    )(x_bf, A, wsr_t, bsr, gamma, beta, wkv_t)

    # ---- kernel 2: q proj + per-head attention (lane-dense softmax) + out proj ----
    # TODO(synk): for tiny N/C the two pallas_calls could be fused into one
    # kernel (kv kept in VMEM) to save a launch and the kv HBM round-trip.
    at_kern = functools.partial(attn_kernel, num_heads=num_heads, head_dim=head_dim)
    out = pl.pallas_call(
        at_kern,
        out_shape=jax.ShapeDtypeStruct((B, N_pad, C), out_dtype),
        grid_spec=pltpu.PrefetchScalarGridSpec(
            num_scalar_prefetch=0,
            grid=(B, N_pad // tq),
            in_specs=[
                pl.BlockSpec((1, tq, C), lambda b, i: (b, i, 0)),     # x tile
                pl.BlockSpec((1, M, 2 * C), lambda b, i: (b, 0, 0)),  # kv (per batch)
                pl.BlockSpec((C, C), lambda b, i: (0, 0)),            # Wq^T * scale
                pl.BlockSpec((C, C), lambda b, i: (0, 0)),            # Wproj^T
                pl.BlockSpec((1, C), lambda b, i: (0, 0)),            # b_proj
            ],
            out_specs=pl.BlockSpec((1, tq, C), lambda b, i: (b, i, 0)),
            scratch_shapes=[pltpu.VMEM((tq, C), bf16)],               # merged heads
        ),
        compiler_params=pltpu.CompilerParams(
            dimension_semantics=("parallel", "parallel"),
            vmem_limit_bytes=vmem_limit),
    )(x_bf, kv, wq_t, wp_t, bp)

    if N_pad != N:
        out = out[:, :N, :]
    return out


def attention_super_reference(x, H, W, params, *, num_heads, pooling_dim):
    """Pure-JAX f32 reference mirroring the PyTorch forward exactly."""
    B, N, C = x.shape
    hd = C // num_heads
    scale = hd ** (-0.5)
    P = pooling_dim

    q = x @ params["wq"].T                                             # (B, N, C)
    q = q.reshape(B, N, num_heads, hd).transpose(0, 2, 1, 3)           # (B, h, N, hd)

    A = jnp.asarray(_adaptive_pool_matrix(H, W, P))                    # (P*P, N)
    x_ = jnp.einsum("mn,bnc->bmc", A, x)                               # pooled tokens
    x_ = x_ @ params["wsr"].reshape(C, C).T + params["bsr"]            # 1x1 conv
    mu = x_.mean(-1, keepdims=True)
    var = ((x_ - mu) ** 2).mean(-1, keepdims=True)
    x_ = (x_ - mu) / jnp.sqrt(var + 1e-5) * params["ln_w"] + params["ln_b"]
    x_ = jax.nn.gelu(x_, approximate=False)

    kv = x_ @ params["wkv"].T                                          # (B, M, 2C)
    kv = kv.reshape(B, P * P, 2, num_heads, hd).transpose(2, 0, 3, 1, 4)
    k, v = kv[0], kv[1]                                                # (B, h, M, hd)

    attn = jnp.einsum("bhnd,bhmd->bhnm", q, k) * scale
    attn = jax.nn.softmax(attn, axis=-1)
    out = jnp.einsum("bhnm,bhmd->bhnd", attn, v)
    out = out.transpose(0, 2, 1, 3).reshape(B, N, C)
    return out @ params["wproj"].T + params["bproj"]


if __name__ == "__main__":
    # Small shapes consistent with the module's forward.
    B, H, W, C = 2, 8, 8, 64
    num_heads = 4
    pooling_dim = 4            # sample_pooling_dim
    N = H * W

    key = jax.random.PRNGKey(0)
    ks = jax.random.split(key, 8)

    params = {
        "wq":    (0.02 * jax.random.normal(ks[0], (C, C))).astype(jnp.float32),
        "wkv":   (0.02 * jax.random.normal(ks[1], (2 * C, C))).astype(jnp.float32),
        "wproj": (0.02 * jax.random.normal(ks[2], (C, C))).astype(jnp.float32),
        "bproj": jnp.zeros((C,), jnp.float32),
        # Conv2D(C, kernel_size=1): weight (C, C, 1, 1), bias (C,) = 0
        "wsr":   (math.sqrt(2.0 / C) * jax.random.normal(ks[3], (C, C, 1, 1))).astype(jnp.float32),
        "bsr":   jnp.zeros((C,), jnp.float32),
        # LayerNormSuper init: weight = 1, bias = 0
        "ln_w":  jnp.ones((C,), jnp.float32),
        "ln_b":  jnp.zeros((C,), jnp.float32),
    }

    x = jax.random.normal(ks[4], (B, N, C), jnp.float32)

    out = attention_super_forward(x, H, W, params, num_heads=num_heads,
                                  pooling_dim=pooling_dim, tq=32)
    out = jax.block_until_ready(out)

    ref = attention_super_reference(x, H, W, params, num_heads=num_heads,
                                    pooling_dim=pooling_dim)
    ref = jax.block_until_ready(ref)

    assert out.shape == (B, N, C)
    # bf16 matmul operands (f32 accumulation) -> loosened tolerance vs the f32 ref.
    np.testing.assert_allclose(np.asarray(out), np.asarray(ref), rtol=2e-2, atol=1e-3)
    print("KERNEL_OK")
</pallas_src>

<mosaic_0001>
module attributes {stable_mosaic.version = 11 : i64} {
  func.func @kv_kernel(%arg0: i32, %arg1: i32, %arg2: memref<1x128x64xbf16, #tpu.memory_space<vmem>>, %arg3: memref<16x128xf32, #tpu.memory_space<vmem>>, %arg4: memref<64x64xbf16, #tpu.memory_space<vmem>>, %arg5: memref<1x64xf32, #tpu.memory_space<vmem>>, %arg6: memref<1x64xf32, #tpu.memory_space<vmem>>, %arg7: memref<1x64xf32, #tpu.memory_space<vmem>>, %arg8: memref<64x128xbf16, #tpu.memory_space<vmem>>, %arg9: memref<1x16x128xbf16, #tpu.memory_space<vmem>>, %arg10: memref<16x64xf32, #tpu.memory_space<vmem>>) attributes {dimension_semantics = [#tpu.dimension_semantics<parallel>, #tpu.dimension_semantics<arbitrary>], iteration_bounds = array<i64: 2, 1>, scalar_prefetch = 0 : i64, scratch_operands = 1 : i64, tpu.core_type = #tpu.core_type<tc>, window_params = [{transform_indices = @transform_0, window_bounds = array<i64: 1, 128, 64>}, {transform_indices = @transform_1, window_bounds = array<i64: 16, 128>}, {pipeline_mode = #tpu.pipeline_mode<synchronous>, transform_indices = @transform_2, window_bounds = array<i64: 64, 64>}, {pipeline_mode = #tpu.pipeline_mode<synchronous>, transform_indices = @transform_3, window_bounds = array<i64: 1, 64>}, {pipeline_mode = #tpu.pipeline_mode<synchronous>, transform_indices = @transform_4, window_bounds = array<i64: 1, 64>}, {pipeline_mode = #tpu.pipeline_mode<synchronous>, transform_indices = @transform_5, window_bounds = array<i64: 1, 64>}, {pipeline_mode = #tpu.pipeline_mode<synchronous>, transform_indices = @transform_6, window_bounds = array<i64: 64, 128>}, {transform_indices = @transform_7, window_bounds = array<i64: 1, 16, 128>}]} {
    %c0_i32 = arith.constant 0 : i32
    %0 = arith.cmpi eq, %arg1, %c0_i32 : i32
    %1 = arith.extui %0 : i1 to i32
    %c0_i32_0 = arith.constant 0 : i32
    %2 = arith.cmpi ne, %1, %c0_i32_0 : i32
    scf.if %2 {
      %cst_11 = arith.constant 0.000000e+00 : f32
      %14 = vector.broadcast %cst_11 : f32 to vector<16x64xf32>
      %c0_12 = arith.constant 0 : index
      %c0_13 = arith.constant 0 : index
      %15 = vector.load %arg10[%c0_12, %c0_13] : memref<16x64xf32, #tpu.memory_space<vmem>>, vector<16x64xf32>
      tpu.vector_store %arg10[%c0_12, %c0_13], %14 {strides = array<i32>} : memref<16x64xf32, #tpu.memory_space<vmem>>, vector<16x64xf32>,
    } else {
    }
    %c0 = arith.constant 0 : index
    %c0_1 = arith.constant 0 : index
    %3 = vector.load %arg10[%c0, %c0_1] : memref<16x64xf32, #tpu.memory_space<vmem>>, vector<16x64xf32>
    %c0_2 = arith.constant 0 : index
    %c0_3 = arith.constant 0 : index
    %4 = vector.load %arg3[%c0_2, %c0_3] : memref<16x128xf32, #tpu.memory_space<vmem>>, vector<16x128xf32>
    %c0_4 = arith.constant 0 : index
    %c0_5 = arith.constant 0 : index
    %c0_6 = arith.constant 0 : index
    %5 = vector.load %arg2[%c0_4, %c0_5, %c0_6] : memref<1x128x64xbf16, #tpu.memory_space<vmem>>, vector<1x128x64xbf16>
    %6 = vector.shape_cast %5 : vector<1x128x64xbf16> to vector<128x64xbf16>
    %7 = arith.extf %6 : vector<128x64xbf16> to vector<128x64xf32>
    %cst = arith.constant dense<0.000000e+00> : vector<16x64xf32>
    %8 = tpu.matmul %4, %7, %cst {dimension_numbers = #tpu.dot_dimension_numbers<[1], [0], [0], [1], [0, 0, 1, 1], [], []>} : vector<16x128xf32>, vector<128x64xf32>, vector<16x64xf32> -> vector<16x64xf32>
    %9 = arith.addf %3, %8 : vector<16x64xf32>
    %c0_7 = arith.constant 0 : index
    %c0_8 = arith.constant 0 : index
    %10 = vector.load %arg10[%c0_7, %c0_8] : memref<16x64xf32, #tpu.memory_space<vmem>>, vector<16x64xf32>
    tpu.vector_store %arg10[%c0_7, %c0_8], %9 {strides = array<i32>} : memref<16x64xf32, #tpu.memory_space<vmem>>, vector<16x64xf32>,
    %c0_i32_9 = arith.constant 0 : i32
    %11 = arith.cmpi eq, %arg1, %c0_i32_9 : i32
    %12 = arith.extui %11 : i1 to i32
    %c0_i32_10 = arith.constant 0 : i32
    %13 = arith.cmpi ne, %12, %c0_i32_10 : i32
    scf.if %13 {
      %c0_11 = arith.constant 0 : index
      %c0_12 = arith.constant 0 : index
      %14 = vector.load %arg10[%c0_11, %c0_12] : memref<16x64xf32, #tpu.memory_space<vmem>>, vector<16x64xf32>
      %15 = arith.truncf %14 : vector<16x64xf32> to vector<16x64xbf16>
      %c0_13 = arith.constant 0 : index
      %c0_14 = arith.constant 0 : index
      %16 = vector.load %arg4[%c0_13, %c0_14] : memref<64x64xbf16, #tpu.memory_space<vmem>>, vector<64x64xbf16>
      %cst_15 = arith.constant dense<0.000000e+00> : vector<16x64xf32>
      %17 = tpu.matmul %15, %16, %cst_15 {dimension_numbers = #tpu.dot_dimension_numbers<[1], [0], [0], [1], [0, 0, 1, 1], [], []>} : vector<16x64xbf16>, vector<64x64xbf16>, vector<16x64xf32> -> vector<16x64xf32>
      %c0_16 = arith.constant 0 : index
      %c0_17 = arith.constant 0 : index
      %18 = vector.load %arg5[%c0_16, %c0_17] : memref<1x64xf32, #tpu.memory_space<vmem>>, vector<1x64xf32>
      %19 = vector.broadcast %18 : vector<1x64xf32> to vector<16x64xf32>
      %20 = arith.addf %17, %19 : vector<16x64xf32>
      %cst_18 = arith.constant dense<0.000000e+00> : vector<16xf32>
      %21 = vector.multi_reduction <add>, %20, %cst_18 [1] : vector<16x64xf32> to vector<16xf32>
      %22 = vector.shape_cast %21 : vector<16xf32> to vector<16x1xf32>
      %cst_19 = arith.constant 6.400000e+01 : f32
      %23 = vector.broadcast %cst_19 : f32 to vector<16x1xf32>
      %24 = arith.divf %22, %23 : vector<16x1xf32>
      %25 = vector.broadcast %24 : vector<16x1xf32> to vector<16x64xf32>
      %26 = arith.subf %20, %25 : vector<16x64xf32>
      %27 = arith.mulf %26, %26 : vector<16x64xf32>
      %cst_20 = arith.constant dense<0.000000e+00> : vector<16xf32>
      %28 = vector.multi_reduction <add>, %27, %cst_20 [1] : vector<16x64xf32> to vector<16xf32>
      %29 = vector.shape_cast %28 : vector<16xf32> to vector<16x1xf32>
      %cst_21 = arith.constant 6.400000e+01 : f32
      %30 = vector.broadcast %cst_21 : f32 to vector<16x1xf32>
      %31 = arith.divf %29, %30 : vector<16x1xf32>
      %32 = vector.broadcast %24 : vector<16x1xf32> to vector<16x64xf32>
      %33 = arith.subf %20, %32 : vector<16x64xf32>
      %cst_22 = arith.constant 9.99999974E-6 : f32
      %34 = vector.broadcast %cst_22 : f32 to vector<16x1xf32>
      %35 = arith.addf %31, %34 : vector<16x1xf32>
      %36 = math.rsqrt %35 : vector<16x1xf32>
      %37 = vector.broadcast %36 : vector<16x1xf32> to vector<16x64xf32>
      %38 = arith.mulf %33, %37 : vector<16x64xf32>
      %c0_23 = arith.constant 0 : index
      %c0_24 = arith.constant 0 : index
      %39 = vector.load %arg6[%c0_23, %c0_24] : memref<1x64xf32, #tpu.memory_space<vmem>>, vector<1x64xf32>
      %40 = vector.broadcast %39 : vector<1x64xf32> to vector<16x64xf32>
      %41 = arith.mulf %38, %40 : vector<16x64xf32>
      %c0_25 = arith.constant 0 : index
      %c0_26 = arith.constant 0 : index
      %42 = vector.load %arg7[%c0_25, %c0_26] : memref<1x64xf32, #tpu.memory_space<vmem>>, vector<1x64xf32>
      %43 = vector.broadcast %42 : vector<1x64xf32> to vector<16x64xf32>
      %44 = arith.addf %41, %43 : vector<16x64xf32>
      %cst_27 = arith.constant 5.000000e-01 : f32
      %45 = vector.broadcast %cst_27 : f32 to vector<16x64xf32>
      %46 = arith.mulf %45, %44 : vector<16x64xf32>
      %cst_28 = arith.constant 0.707106769 : f32
      %47 = vector.broadcast %cst_28 : f32 to vector<16x64xf32>
      %48 = arith.mulf %44, %47 : vector<16x64xf32>
      %49 = math.erf %48 : vector<16x64xf32>
      %cst_29 = arith.constant 1.000000e+00 : f32
      %50 = vector.broadcast %cst_29 : f32 to vector<16x64xf32>
      %51 = arith.addf %50, %49 : vector<16x64xf32>
      %52 = arith.mulf %46, %51 : vector<16x64xf32>
      %53 = arith.truncf %52 : vector<16x64xf32> to vector<16x64xbf16>
      %c0_30 = arith.constant 0 : index
      %c0_31 = arith.constant 0 : index
      %54 = vector.load %arg8[%c0_30, %c0_31] : memref<64x128xbf16, #tpu.memory_space<vmem>>, vector<64x128xbf16>
      %cst_32 = arith.constant dense<0.000000e+00> : vector<16x128xf32>
      %55 = tpu.matmul %53, %54, %cst_32 {dimension_numbers = #tpu.dot_dimension_numbers<[1], [0], [0], [1], [0, 0, 1, 1], [], []>} : vector<16x64xbf16>, vector<64x128xbf16>, vector<16x128xf32> -> vector<16x128xf32>
      %56 = arith.truncf %55 : vector<16x128xf32> to vector<16x128xbf16>
      %c0_33 = arith.constant 0 : index
      %c0_34 = arith.constant 0 : index
      %c0_35 = arith.constant 0 : index
      %57 = vector.load %arg9[%c0_33, %c0_34, %c0_35] : memref<1x16x128xbf16, #tpu.memory_space<vmem>>, vector<1x16x128xbf16>
      %58 = vector.shape_cast %57 : vector<1x16x128xbf16> to vector<16x128xbf16>
      %59 = vector.shape_cast %56 : vector<16x128xbf16> to vector<1x16x128xbf16>
      tpu.vector_store %arg9[%c0_33, %c0_34, %c0_35], %59 {strides = array<i32>} : memref<1x16x128xbf16, #tpu.memory_space<vmem>>, vector<1x16x128xbf16>,
    } else {
    }
    return
  }
  func.func @transform_0(%arg0: i32, %arg1: i32) -> (i32, i32, i32) {
    %c0_i32 = arith.constant 0 : i32
    %c0_i32_0 = arith.constant 0 : i32
    return %arg0, %arg1, %c0_i32 : i32, i32, i32
  }
  func.func @transform_1(%arg0: i32, %arg1: i32) -> (i32, i32) {
    %c0_i32 = arith.constant 0 : i32
    %c0_i32_0 = arith.constant 0 : i32
    return %c0_i32, %arg1 : i32, i32
  }
  func.func @transform_2(%arg0: i32, %arg1: i32) -> (i32, i32) {
    %c0_i32 = arith.constant 0 : i32
    %c0_i32_0 = arith.constant 0 : i32
    %c0_i32_1 = arith.constant 0 : i32
    return %c0_i32, %c0_i32_0 : i32, i32
  }
  func.func @transform_3(%arg0: i32, %arg1: i32) -> (i32, i32) {
    %c0_i32 = arith.constant 0 : i32
    %c0_i32_0 = arith.constant 0 : i32
    %c0_i32_1 = arith.constant 0 : i32
    return %c0_i32, %c0_i32_0 : i32, i32
  }
  func.func @transform_4(%arg0: i32, %arg1: i32) -> (i32, i32) {
    %c0_i32 = arith.constant 0 : i32
    %c0_i32_0 = arith.constant 0 : i32
    %c0_i32_1 = arith.constant 0 : i32
    return %c0_i32, %c0_i32_0 : i32, i32
  }
  func.func @transform_5(%arg0: i32, %arg1: i32) -> (i32, i32) {
    %c0_i32 = arith.constant 0 : i32
    %c0_i32_0 = arith.constant 0 : i32
    %c0_i32_1 = arith.constant 0 : i32
    return %c0_i32, %c0_i32_0 : i32, i32
  }
  func.func @transform_6(%arg0: i32, %arg1: i32) -> (i32, i32) {
    %c0_i32 = arith.constant 0 : i32
    %c0_i32_0 = arith.constant 0 : i32
    %c0_i32_1 = arith.constant 0 : i32
    return %c0_i32, %c0_i32_0 : i32, i32
  }
  func.func @transform_7(%arg0: i32, %arg1: i32) -> (i32, i32, i32) {
    %c0_i32 = arith.constant 0 : i32
    %c0_i32_0 = arith.constant 0 : i32
    %c0_i32_1 = arith.constant 0 : i32
    return %arg0, %c0_i32, %c0_i32_0 : i32, i32, i32
  }
}

</mosaic_0001>

<llo_original>
// kernel: tpu_custom_call.1
$region0: #{tpu_custom_call.1}
  #allocation0 [shape = 'u32[]', space=smem, size = 0x4, offset = 0x4, fixed_abs, tag = 'smem constant byte address 0x4 - core index']
  #allocation1 [shape = 'u32[144,128]{1,0:T(1,128)}', space=vmem, size = 0x12000, scoped, tag = 'internal scratch']
  #allocation2 [shape = 'f32[16,64]{1,0:T(8,128)}', space=vmem, size = 0x2000, scoped, tag = 'scratch operand']
  %s0 = inlined_call_operand.vmem [shape: bf16[2,128,64], index: 0, kind: input, shape index: {}]
  %s1 = inlined_call_operand.vmem [shape: f32[16,128], index: 1, kind: input, shape index: {}]
  %s2 = inlined_call_operand.vmem [shape: bf16[64,64], index: 2, kind: input, shape index: {}]
  %s3 = inlined_call_operand.vmem [shape: f32[1,64], index: 3, kind: input, shape index: {}]
  %s4 = inlined_call_operand.vmem [shape: f32[1,64], index: 4, kind: input, shape index: {}]
  %s5 = inlined_call_operand.vmem [shape: f32[1,64], index: 5, kind: input, shape index: {}]
  %s6 = inlined_call_operand.vmem [shape: bf16[64,128], index: 6, kind: input, shape index: {}]
  %s7 = inlined_call_operand.hbm [shape: bf16[2,16,128], index: 7, kind: output, shape index: {}]
  %s8 = sld [smem:[#allocation0]]
  $region69: #{tpu_custom_call.1} parent=0
    _
  %s10 = ssub.s32 1, %s8
  %s11 = scalar_select 0, %s10, %s8
  $region1: #{tpu_custom_call.1} parent=0
    #allocation3 [shape = 'u8[8192]{0}', space=vmem, size = 0x2000, scoped, tag = 'output window, operand 0']
    #allocation4 [shape = 's32[2]{0}', space=sflag, size = 0x8, scoped, tag = 'scoped memory for tpu_custom_call.1']
    %12 = vsyncpa [#allocation4], 0
    %s13 = scalar_lea.sflag [#allocation4], 1
    %14 = vsyncpa %s13, 0
    loop: start=0, step=1, limit=4
    $region2: #{tpu_custom_call.1} parent=1 // loop_pre_header
      _
    $region3: #{tpu_custom_call.1} parent=1 // loop_header
      %s16 = sphi 0, %s20
      %p17 = scmp.ge.s32.totalorder %s16, 4
      %s23 = sphi 0, %s35
      %s24 = sphi 0, %s31
      %s25 = sphi 0, %s23
      %s26 = sphi 0, %s24
      %s27 = sphi 0, %s25
      %s28 = sphi 0, %s26
      %s40 = sphi 0, %s42
      %s43 = sphi 0, %s40
      %s44 = sphi 0, %s43
      %s60 = sphi 0, %s44
      %s66 = sphi 0, %s68
      %s69 = sphi 0, %s66
      %s70 = sphi 0, %s69
      %s86 = sphi 0, %s70
      %s90 = sphi 0, %s90
      %s92 = sphi 0, %s90
      %s93 = sphi 0, %s92
      %s107 = sphi 0, %s93
      %s111 = sphi 0, %s111
      %s113 = sphi 0, %s111
      %s114 = sphi 0, %s113
      %s128 = sphi 0, %s114
      %s132 = sphi 0, %s132
      %s134 = sphi 0, %s132
      %s135 = sphi 0, %s134
      %s149 = sphi 0, %s135
      %s153 = sphi 0, %s153
      %s155 = sphi 0, %s153
      %s156 = sphi 0, %s155
      %s170 = sphi 0, %s156
      %s174 = sphi 0, %s174
      %s176 = sphi 0, %s174
      %s177 = sphi 0, %s176
      %s191 = sphi 0, %s177
      %s197 = sphi 0, %s199
      %s200 = sphi 0, %s197
      %s201 = sphi 0, %s200
      %s217 = sphi 0, %s201
    $region4: #{tpu_custom_call.1} parent=1 // loop_header_branch
      %19 = sbr.rel (%p17) target = $region8
    $region5: #{tpu_custom_call.1} parent=1 // loop_body
      %s21 = ssub.s32 %s16, 1
      %s22 = ssub.s32 %s16, 2
      %s29 = sadd.s32 1, %s24
      %p30 = scmp.ge.s32.totalorder %s29, 1
      %s31 = scalar_select %p30, 0, %s29
      %s32 = sadd.s32 1, %s23
      %s33 = scalar_select %p30, %s32, %s23
      %p34 = scmp.ge.s32.totalorder %s33, 2
      %s35 = scalar_select %p34, 0, %s33
      %s36 = ssub.s32 %s23, %s35
      %s37 = ssub.s32 %s24, %s31
      %s38 = sor.u32 %s36, %s37
      %p39 = scmp.eq.s32.totalorder %s38, 0
      %s41 = sadd.s32 %s40, 1
      %s42 = scalar_select %p39, %s40, %s41
      %p45 = pneg %p39
      %p46 = scmp.eq.s32.totalorder %s16, 1
      %p47 = por %p45, %p46
      %p48 = scmp.ne.s32.totalorder %s40, %s43
      %p49 = scmp.eq.s32.totalorder %s16, 0
      %p50 = por %p48, %p49
      %p51 = scmp.ne.s32.totalorder %s40, %s43
      %p52 = scmp.eq.s32.totalorder %s21, 1
      %p53 = por %p51, %p52
      %p54 = scmp.ne.s32.totalorder %s43, %s44
      %p55 = scmp.eq.s32.totalorder %s21, 0
      %p56 = por %p54, %p55
      %p57 = scmp.ne.s32.totalorder %s43, %s44
      %p58 = scmp.eq.s32.totalorder %s22, 1
      %p59 = por %p57, %p58
      %p61 = scmp.ne.s32.totalorder %s44, %s60
      %p62 = scmp.eq.s32.totalorder %s22, 0
      %p63 = por %p61, %p62
      %s64 = ssub.s32 %s24, %s31
      %p65 = scmp.eq.s32.totalorder %s64, 0
      %s67 = sadd.s32 %s66, 1
      %s68 = scalar_select %p65, %s66, %s67
      %p71 = pneg %p65
      %p72 = scmp.eq.s32.totalorder %s16, 1
      %p73 = por %p71, %p72
      %p74 = scmp.ne.s32.totalorder %s66, %s69
      %p75 = scmp.eq.s32.totalorder %s16, 0
      %p76 = por %p74, %p75
      %p77 = scmp.ne.s32.totalorder %s66, %s69
      %p78 = scmp.eq.s32.totalorder %s21, 1
      %p79 = por %p77, %p78
      %p80 = scmp.ne.s32.totalorder %s69, %s70
      %p81 = scmp.eq.s32.totalorder %s21, 0
      %p82 = por %p80, %p81
      %p83 = scmp.ne.s32.totalorder %s69, %s70
      %p84 = scmp.eq.s32.totalorder %s22, 1
      %p85 = por %p83, %p84
      %p87 = scmp.ne.s32.totalorder %s70, %s86
      %p88 = scmp.eq.s32.totalorder %s22, 0
      %p89 = por %p87, %p88
      %s91 = sadd.s32 %s90, 1
      %p94 = scmp.eq.s32.totalorder %s16, 1
      %p95 = scmp.ne.s32.totalorder %s90, %s92
      %p96 = scmp.eq.s32.totalorder %s16, 0
      %p97 = por %p95, %p96
      %p98 = scmp.ne.s32.totalorder %s90, %s92
      %p99 = scmp.eq.s32.totalorder %s21, 1
      %p100 = por %p98, %p99
      %p101 = scmp.ne.s32.totalorder %s92, %s93
      %p102 = scmp.eq.s32.totalorder %s21, 0
      %p103 = por %p101, %p102
      %p104 = scmp.ne.s32.totalorder %s92, %s93
      %p105 = scmp.eq.s32.totalorder %s22, 1
      %p106 = por %p104, %p105
      %p108 = scmp.ne.s32.totalorder %s93, %s107
      %p109 = scmp.eq.s32.totalorder %s22, 0
      %p110 = por %p108, %p109
      %s112 = sadd.s32 %s111, 1
      %p115 = scmp.eq.s32.totalorder %s16, 1
      %p116 = scmp.ne.s32.totalorder %s111, %s113
      %p117 = scmp.eq.s32.totalorder %s16, 0
      %p118 = por %p116, %p117
      %p119 = scmp.ne.s32.totalorder %s111, %s113
      %p120 = scmp.eq.s32.totalorder %s21, 1
      %p121 = por %p119, %p120
      %p122 = scmp.ne.s32.totalorder %s113, %s114
      %p123 = scmp.eq.s32.totalorder %s21, 0
      %p124 = por %p122, %p123
      %p125 = scmp.ne.s32.totalorder %s113, %s114
      %p126 = scmp.eq.s32.totalorder %s22, 1
      %p127 = por %p125, %p126
      %p129 = scmp.ne.s32.totalorder %s114, %s128
      %p130 = scmp.eq.s32.totalorder %s22, 0
      %p131 = por %p129, %p130
      %s133 = sadd.s32 %s132, 1
      %p136 = scmp.eq.s32.totalorder %s16, 1
      %p137 = scmp.ne.s32.totalorder %s132, %s134
      %p138 = scmp.eq.s32.totalorder %s16, 0
      %p139 = por %p137, %p138
      %p140 = scmp.ne.s32.totalorder %s132, %s134
      %p141 = scmp.eq.s32.totalorder %s21, 1
      %p142 = por %p140, %p141
      %p143 = scmp.ne.s32.totalorder %s134, %s135
      %p144 = scmp.eq.s32.totalorder %s21, 0
      %p145 = por %p143, %p144
      %p146 = scmp.ne.s32.totalorder %s134, %s135
      %p147 = scmp.eq.s32.totalorder %s22, 1
      %p148 = por %p146, %p147
      %p150 = scmp.ne.s32.totalorder %s135, %s149
      %p151 = scmp.eq.s32.totalorder %s22, 0
      %p152 = por %p150, %p151
      %s154 = sadd.s32 %s153, 1
      %p157 = scmp.eq.s32.totalorder %s16, 1
      %p158 = scmp.ne.s32.totalorder %s153, %s155
      %p159 = scmp.eq.s32.totalorder %s16, 0
      %p160 = por %p158, %p159
      %p161 = scmp.ne.s32.totalorder %s153, %s155
      %p162 = scmp.eq.s32.totalorder %s21, 1
      %p163 = por %p161, %p162
      %p164 = scmp.ne.s32.totalorder %s155, %s156
      %p165 = scmp.eq.s32.totalorder %s21, 0
      %p166 = por %p164, %p165
      %p167 = scmp.ne.s32.totalorder %s155, %s156
      %p168 = scmp.eq.s32.totalorder %s22, 1
      %p169 = por %p167, %p168
      %p171 = scmp.ne.s32.totalorder %s156, %s170
      %p172 = scmp.eq.s32.totalorder %s22, 0
      %p173 = por %p171, %p172
      %s175 = sadd.s32 %s174, 1
      %p178 = scmp.eq.s32.totalorder %s16, 1
      %p179 = scmp.ne.s32.totalorder %s174, %s176
      %p180 = scmp.eq.s32.totalorder %s16, 0
      %p181 = por %p179, %p180
      %p182 = scmp.ne.s32.totalorder %s174, %s176
      %p183 = scmp.eq.s32.totalorder %s21, 1
      %p184 = por %p182, %p183
      %p185 = scmp.ne.s32.totalorder %s176, %s177
      %p186 = scmp.eq.s32.totalorder %s21, 0
      %p187 = por %p185, %p186
      %p188 = scmp.ne.s32.totalorder %s176, %s177
      %p189 = scmp.eq.s32.totalorder %s22, 1
      %p190 = por %p188, %p189
      %p192 = scmp.ne.s32.totalorder %s177, %s191
      %p193 = scmp.eq.s32.totalorder %s22, 0
      %p194 = por %p192, %p193
      %s195 = ssub.s32 %s23, %s35
      %p196 = scmp.eq.s32.totalorder %s195, 0
      %s198 = sadd.s32 %s197, 1
      %s199 = scalar_select %p196, %s197, %s198
      %p202 = pneg %p196
      %p203 = scmp.eq.s32.totalorder %s16, 1
      %p204 = por %p202, %p203
      %p205 = scmp.ne.s32.totalorder %s197, %s200
      %p206 = scmp.eq.s32.totalorder %s16, 0
      %p207 = por %p205, %p206
      %p208 = scmp.ne.s32.totalorder %s197, %s200
      %p209 = scmp.eq.s32.totalorder %s21, 1
      %p210 = por %p208, %p209
      %p211 = scmp.ne.s32.totalorder %s200, %s201
      %p212 = scmp.eq.s32.totalorder %s21, 0
      %p213 = por %p211, %p212
      %p214 = scmp.ne.s32.totalorder %s200, %s201
      %p215 = scmp.eq.s32.totalorder %s22, 1
      %p216 = por %p214, %p215
      %p218 = scmp.ne.s32.totalorder %s201, %s217
      %p219 = scmp.eq.s32.totalorder %s22, 0
      %p220 = por %p218, %p219
      %p221 = scmp.le.s32.totalorder 1, %s16
      %p222 = scmp.lt.s32.totalorder %s16, 3
      %p223 = pnand %p221, %p222
      %p224 = pneg %p223
      // Predicated region
      $region9: #{tpu_custom_call.1} parent=5 // pred_check
        _
      $region10: #{tpu_custom_call.1} parent=5 // pred_check_branch
        %226 = sbr.rel (%p223) target = $region12
      $region11: #{tpu_custom_call.1} parent=5 // pred_region
        %s227 = ssub.s32 %s16, 1
        // Predicated region
        $region13: #{tpu_custom_call.1} parent=11 // pred_check
          %p228 = pneg %p82
        $region14: #{tpu_custom_call.1} parent=11 // pred_check_branch
          %230 = sbr.rel (%p228) target = $region16
        $region15: #{tpu_custom_call.1} parent=11 // pred_region
          %p231 = scmp.lt.s32.totalorder %s26, 0
          %s232 = scalar_select %p231, %s26, 0
          %s233 = smul.addr %s232, 8
          %s234 = scalar_lea.vmem %s1, %s233
        $region16: #{tpu_custom_call.1} parent=11 // pred_fallthru
          _
        // Predicated region
        $region17: #{tpu_custom_call.1} parent=11 // pred_check
          %p235 = pneg %p103
        $region18: #{tpu_custom_call.1} parent=11 // pred_check_branch
          %237 = sbr.rel (%p235) target = $region20
        $region19: #{tpu_custom_call.1} parent=11 // pred_region
          _
        $region20: #{tpu_custom_call.1} parent=11 // pred_fallthru
          _
        // Predicated region
        $region21: #{tpu_custom_call.1} parent=11 // pred_check
          %p238 = pneg %p124
        $region22: #{tpu_custom_call.1} parent=11 // pred_check_branch
          %240 = sbr.rel (%p238) target = $region24
        $region23: #{tpu_custom_call.1} parent=11 // pred_region
          _
        $region24: #{tpu_custom_call.1} parent=11 // pred_fallthru
          _
        // Predicated region
        $region25: #{tpu_custom_call.1} parent=11 // pred_check
          %p241 = pneg %p145
        $region26: #{tpu_custom_call.1} parent=11 // pred_check_branch
          %243 = sbr.rel (%p241) target = $region28
        $region27: #{tpu_custom_call.1} parent=11 // pred_region
          _
        $region28: #{tpu_custom_call.1} parent=11 // pred_fallthru
          _
        // Predicated region
        $region29: #{tpu_custom_call.1} parent=11 // pred_check
          %p244 = pneg %p166
        $region30: #{tpu_custom_call.1} parent=11 // pred_check_branch
          %246 = sbr.rel (%p244) target = $region32
        $region31: #{tpu_custom_call.1} parent=11 // pred_region
          _
        $region32: #{tpu_custom_call.1} parent=11 // pred_fallthru
          _
        // Predicated region
        $region33: #{tpu_custom_call.1} parent=11 // pred_check
          %p247 = pneg %p187
        $region34: #{tpu_custom_call.1} parent=11 // pred_check_branch
          %249 = sbr.rel (%p247) target = $region36
        $region35: #{tpu_custom_call.1} parent=11 // pred_region
          _
        $region36: #{tpu_custom_call.1} parent=11 // pred_fallthru
          _
      $region12: #{tpu_custom_call.1} parent=5 // pred_fallthru
        _
      %p250 = scmp.lt.s32.totalorder %s16, 2
      // Predicated region
      $region37: #{tpu_custom_call.1} parent=5 // pred_check
        %p251 = pneg %p250
      $region38: #{tpu_custom_call.1} parent=5 // pred_check_branch
        %253 = sbr.rel (%p251) target = $region40
      $region39: #{tpu_custom_call.1} parent=5 // pred_region
        // Predicated region
        $region41: #{tpu_custom_call.1} parent=39 // pred_check
          %p254 = pneg %p50
        $region42: #{tpu_custom_call.1} parent=39 // pred_check_branch
          %256 = sbr.rel (%p254) target = $region44
        $region43: #{tpu_custom_call.1} parent=39 // pred_region
          %s257 = smul.u32 16, %s24
          %p258 = scmp.lt.s32.totalorder %s23, 1
          %s259 = scalar_select %p258, %s23, 1
          %p260 = scmp.lt.s32.totalorder %s257, 15
          %s261 = scalar_select %p260, %s257, 15
          %s262 = smul.addr %s259, 16
          %s263 = sadd.s32 %s261, %s262
          %s264 = smul.addr %s263, 4
          %s265 = scalar_lea.vmem %s0, %s264
          %s266 = smul.u32 16, %s24
        $region44: #{tpu_custom_call.1} parent=39 // pred_fallthru
          _
      $region40: #{tpu_custom_call.1} parent=5 // pred_fallthru
        _
      %p267 = scmp.le.s32.totalorder 1, %s16
      %p268 = scmp.lt.s32.totalorder %s16, 3
      %p269 = pnand %p267, %p268
      %p270 = pneg %p269
      // Predicated region
      $region45: #{tpu_custom_call.1} parent=5 // pred_check
        _
      $region46: #{tpu_custom_call.1} parent=5 // pred_check_branch
        %272 = sbr.rel (%p269) target = $region48
      $region47: #{tpu_custom_call.1} parent=5 // pred_region
        %s273 = ssub.s32 %s16, 1
        %s274 = smul.u32 16, %s26
        %p275 = scmp.lt.s32.totalorder %s25, 1
        %s276 = scalar_select %p275, %s25, 1
        %p277 = scmp.lt.s32.totalorder %s274, 15
        %s278 = scalar_select %p277, %s274, 15
        %s279 = smul.addr %s276, 16
        %s280 = sadd.s32 %s278, %s279
        %s281 = smul.addr %s280, 4
        %s282 = scalar_lea.vmem %s0, %s281
        %p283 = pneg %p56
        %p284 = pneg %p53
        %p285 = scmp.lt.s32.totalorder %s26, 0
        %s286 = scalar_select %p285, %s26, 0
        %s287 = smul.addr %s286, 8
        %s288 = scalar_lea.vmem %s1, %s287
        %p289 = pneg %p82
        %p290 = pneg %p79
        %p291 = pneg %p103
        %p292 = pneg %p100
        %p293 = pneg %p124
        %p294 = pneg %p121
        %p295 = pneg %p145
        %p296 = pneg %p142
        %p297 = pneg %p166
        %p298 = pneg %p163
        %p299 = pneg %p187
        %p300 = pneg %p184
        %p301 = pneg %p213
        %p302 = pneg %p210
        %s303 = sand.u32 %s200, 1
        %s304 = scalar_lea.sflag [#allocation4], %s303
        %s305 = sand.u32 %s200, 1
        %s306 = smul.addr %s305, 8
        %s307 = scalar_lea.vmem [#allocation3], %s306
        %s308 = smul.u32 16, %s26
        %p309 = scmp.lt.s32.totalorder %s25, 1
        %s310 = scalar_select %p309, %s25, 1
        %p311 = scmp.lt.s32.totalorder %s308, 15
        %s312 = scalar_select %p311, %s308, 15
        %s313 = smul.addr %s310, 16
        %s314 = sadd.s32 %s312, %s313
        %s315 = smul.addr %s314, 4
        %s316 = scalar_lea.vmem %s0, %s315
        %s317 = smul.u32 16, %s26
        %p318 = scmp.lt.s32.totalorder %s26, 0
        %s319 = scalar_select %p318, %s26, 0
        %s320 = smul.addr %s319, 8
        %s321 = scalar_lea.vmem %s1, %s320
        %p323 = scmp.eq.s32.totalorder %s26, 0
        // Predicated region
        $region49: #{tpu_custom_call.1} parent=47 // pred_check
          %p324 = pneg %p323
        $region50: #{tpu_custom_call.1} parent=47 // pred_check_branch
          %326 = sbr.rel (%p324) target = $region52
        $region51: #{tpu_custom_call.1} parent=47 // pred_region
          %vm327 = vcmask 523264
          %328 = vst.msk [vmem:[#allocation2] sm:$0xff] %vm327, 0.0
          %329 = vst.msk [vmem:[#allocation2 + $0x8] sm:$0xff] %vm327, 0.0
        $region52: #{tpu_custom_call.1} parent=47 // pred_fallthru
          _
        %v330 = vld [vmem:[#allocation2] sm:$0xff]
        %v331 = vld [vmem:[#allocation2 + $0x8] sm:$0xff]
        %v332 = vld [vmem:[%s321] sm:$0xff]
        %v333 = vld [vmem:[%s321 + $0x8] sm:$0xff]
        %v334 = vld [vmem:[%s316] sm:$0xf]
        %v335 = vld [vmem:[%s316 + $0x4] sm:$0xf]
        %v336 = vld [vmem:[%s316 + $0x8] sm:$0xf]
        %v337 = vld [vmem:[%s316 + $0xc] sm:$0xf]
        %v338 = vld [vmem:[%s316 + $0x10] sm:$0xf]
        %v339 = vld [vmem:[%s316 + $0x14] sm:$0xf]
        %v340 = vld [vmem:[%s316 + $0x18] sm:$0xf]
        %v341 = vld [vmem:[%s316 + $0x1c] sm:$0xf]
        %v342 = vld [vmem:[%s316 + $0x20] sm:$0xf]
        %v343 = vld [vmem:[%s316 + $0x24] sm:$0xf]
        %v344 = vld [vmem:[%s316 + $0x28] sm:$0xf]
        %v345 = vld [vmem:[%s316 + $0x2c] sm:$0xf]
        %v346 = vld [vmem:[%s316 + $0x30] sm:$0xf]
        %v347 = vld [vmem:[%s316 + $0x34] sm:$0xf]
        %v348 = vld [vmem:[%s316 + $0x38] sm:$0xf]
        %v349 = vld [vmem:[%s316 + $0x3c] sm:$0xf]
        %v350 = vunpack.c.l.bf16 %v334
        %v351 = vunpack.c.l.bf16 %v335
        %v352 = vunpack.c.l.bf16 %v336
        %v353 = vunpack.c.l.bf16 %v337
        %v354 = vunpack.c.l.bf16 %v338
        %v355 = vunpack.c.l.bf16 %v339
        %v356 = vunpack.c.l.bf16 %v340
        %v357 = vunpack.c.l.bf16 %v341
        %v358 = vunpack.c.l.bf16 %v342
        %v359 = vunpack.c.l.bf16 %v343
        %v360 = vunpack.c.l.bf16 %v344
        %v361 = vunpack.c.l.bf16 %v345
        %v362 = vunpack.c.l.bf16 %v346
        %v363 = vunpack.c.l.bf16 %v347
        %v364 = vunpack.c.l.bf16 %v348
        %v365 = vunpack.c.l.bf16 %v349
        %366 = vmatprep.subr.mxu0 0.0
        %367 = vmatpush1.msra.mxu0 %v350
        %368 = vmatprep.subr.mxu0 0.0
        %369 = vmatpush1.msra.mxu0 %v351
        %370 = vmatprep.subr.mxu0 0.0
        %371 = vmatpush1.msra.mxu0 %v352
        %372 = vmatprep.subr.mxu0 0.0
        %373 = vmatpush1.msra.mxu0 %v353
        %374 = vmatprep.subr.mxu0 0.0
        %375 = vmatpush1.msra.mxu0 %v354
        %376 = vmatprep.subr.mxu0 0.0
        %377 = vmatpush1.msra.mxu0 %v355
        %378 = vmatprep.subr.mxu0 0.0
        %379 = vmatpush1.msra.mxu0 %v356
        %380 = vmatprep.subr.mxu0 0.0
        %381 = vmatpush1.msra.mxu0 %v357
        %382 = vmatprep.subr.mxu0 0.0
        %383 = vmatpush1.msra.mxu0 %v358
        %384 = vmatprep.subr.mxu0 0.0
        %385 = vmatpush1.msra.mxu0 %v359
        %386 = vmatprep.subr.mxu0 0.0
        %387 = vmatpush1.msra.mxu0 %v360
        %388 = vmatprep.subr.mxu0 0.0
        %389 = vmatpush1.msra.mxu0 %v361
        %390 = vmatprep.subr.mxu0 0.0
        %391 = vmatpush1.msra.mxu0 %v362
        %392 = vmatprep.subr.mxu0 0.0
        %393 = vmatpush1.msra.mxu0 %v363
        %394 = vmatprep.subr.mxu0 0.0
        %395 = vmatpush1.msra.mxu0 %v364
        %396 = vmatprep.subr.mxu0 0.0
        %397 = vmatpush1.msra.mxu0 %v365
        %398 = vmatprep.subr.mxu0 0.0
        %399 = vmatpush1.msra.mxu0 0.0
        %400 = vmatprep.subr.mxu0 0.0
        %401 = vmatpush1.msra.mxu0 0.0
        %402 = vmatprep.subr.mxu0 0.0
        %403 = vmatpush1.msra.mxu0 0.0
        %404 = vmatprep.subr.mxu0 0.0
        %405 = vmatpush1.msra.mxu0 0.0
        %406 = vmatprep.subr.mxu0 0.0
        %407 = vmatpush1.msra.mxu0 0.0
        %408 = vmatprep.subr.mxu0 0.0
        %409 = vmatpush1.msra.mxu0 0.0
        %410 = vmatprep.subr.mxu0 0.0
        %411 = vmatpush1.msra.mxu0 0.0
        %412 = vmatprep.subr.mxu0 0.0
        %413 = vmatpush1.msra.mxu0 0.0
        %414 = vmatprep.subr.mxu0 0.0
        %415 = vmatpush1.msra.mxu0 0.0
        %416 = vmatprep.subr.mxu0 0.0
        %417 = vmatpush1.msra.mxu0 0.0
        %418 = vmatprep.subr.mxu0 0.0
        %419 = vmatpush1.msra.mxu0 0.0
        %420 = vmatprep.subr.mxu0 0.0
        %421 = vmatpush1.msra.mxu0 0.0
        %422 = vmatprep.subr.mxu0 0.0
        %423 = vmatpush1.msra.mxu0 0.0
        %424 = vmatprep.subr.mxu0 0.0
        %425 = vmatpush1.msra.mxu0 0.0
        %426 = vmatprep.subr.mxu0 0.0
        %427 = vmatpush1.msra.mxu0 0.0
        %428 = vmatprep.subr.mxu0 0.0
        %429 = vmatpush1.msra.mxu0 0.0
        %430 = vmatprep.mubr.f32.mxu0 0.0
        %431 = vmatmul.mubr.f32.gmra.mrb[0].mxu0 %v332
        %v432 = vpop.f32.mrb[0].mxu0
        %v433 = vadd.f32 0.0, %v432
        %v434 = vpop.f32.mrb[0].mxu0
        %435 = vmatprep.mubr.f32.mxu0 0.0
        %436 = vmatmul.mubr.f32.gmra.mrb[0].mxu0 %v333
        %v437 = vpop.f32.mrb[0].mxu0
        %v438 = vadd.f32 0.0, %v437
        %v439 = vpop.f32.mrb[0].mxu0
        %440 = vdwg.mxu0
        %v441 = vadd.f32 %v330, %v433
        %v442 = vadd.f32 %v331, %v438
        %vm443 = vcmask 523264
        %444 = vst.msk [vmem:[#allocation2] sm:$0xff] %vm443, %v441
        %445 = vst.msk [vmem:[#allocation2 + $0x8] sm:$0xff] %vm443, %v442
        // Predicated region
        $region53: #{tpu_custom_call.1} parent=47 // pred_check
          %p446 = pneg %p323
        $region54: #{tpu_custom_call.1} parent=47 // pred_check_branch
          %448 = sbr.rel (%p446) target = $region56
        $region55: #{tpu_custom_call.1} parent=47 // pred_region
          %v449 = vld [vmem:[#allocation2] sm:$0xff]
          %v450 = vld [vmem:[#allocation2 + $0x8] sm:$0xff]
          %v451 = vpack.c.bf16 %v450, %v449
          %v452 = vld [vmem:[%s2] sm:$0xf]
          %v453 = vld [vmem:[%s2 + $0x4] sm:$0xf]
          %v454 = vld [vmem:[%s2 + $0x8] sm:$0xf]
          %v455 = vld [vmem:[%s2 + $0xc] sm:$0xf]
          %v456 = vld [vmem:[%s2 + $0x10] sm:$0xf]
          %v457 = vld [vmem:[%s2 + $0x14] sm:$0xf]
          %v458 = vld [vmem:[%s2 + $0x18] sm:$0xf]
          %v459 = vld [vmem:[%s2 + $0x1c] sm:$0xf]
          %v460 = vld [vmem:[%s3] sm:$0x1]
          %v462 = vlaneseq
          %v463 = vshrl.u32 %v462, 7
          %v464 = vsub.s32 0, %v463
          %v465 = vrot.slane %v460, %v464
          %v475 = vunpack.c.l.b16 %v452
          %v476 = vunpack.c.l.b16 %v453
          %v477 = vunpack.c.l.b16 %v454
          %v478 = vunpack.c.l.b16 %v455
          %v479 = vunpack.c.l.b16 %v456
          %v480 = vunpack.c.l.b16 %v457
          %v481 = vunpack.c.l.b16 %v458
          %v482 = vunpack.c.l.b16 %v459
          %v483 = vpack.c.b16 %v476, %v475
          %v484 = vpack.c.b16 %v478, %v477
          %v485 = vpack.c.b16 %v480, %v479
          %v486 = vpack.c.b16 %v482, %v481
          %v492 = vsel %vm443, %v451, 0
          %494 = vmatprep.subr.bf16.mxu0 0
          %495 = vmatpush1.bf16.msra.mxu0 %v483
          %496 = vmatprep.subr.bf16.mxu0 0
          %497 = vmatpush1.bf16.msra.mxu0 %v484
          %498 = vmatprep.subr.bf16.mxu0 0
          %499 = vmatpush1.bf16.msra.mxu0 %v485
          %500 = vmatprep.subr.bf16.mxu0 0
          %501 = vmatpush1.bf16.msra.mxu0 %v486
          %502 = vmatprep.subr.bf16.mxu0 0
          %503 = vmatpush1.bf16.msra.mxu0 0
          %504 = vmatprep.subr.bf16.mxu0 0
          %505 = vmatpush1.bf16.msra.mxu0 0
          %506 = vmatprep.subr.bf16.mxu0 0
          %507 = vmatpush1.bf16.msra.mxu0 0
          %508 = vmatprep.subr.bf16.mxu0 0
          %509 = vmatpush1.bf16.msra.mxu0 0
          %510 = vmatprep.subr.bf16.mxu0 0
          %511 = vmatpush1.bf16.msra.mxu0 0
          %512 = vmatprep.subr.bf16.mxu0 0
          %513 = vmatpush1.bf16.msra.mxu0 0
          %514 = vmatprep.subr.bf16.mxu0 0
          %515 = vmatpush1.bf16.msra.mxu0 0
          %516 = vmatprep.subr.bf16.mxu0 0
          %517 = vmatpush1.bf16.msra.mxu0 0
          %518 = vmatprep.subr.bf16.mxu0 0
          %519 = vmatpush1.bf16.msra.mxu0 0
          %520 = vmatprep.subr.bf16.mxu0 0
          %521 = vmatpush1.bf16.msra.mxu0 0
          %522 = vmatprep.subr.bf16.mxu0 0
          %523 = vmatpush1.bf16.msra.mxu0 0
          %524 = vmatprep.subr.bf16.mxu0 0
          %525 = vmatpush1.bf16.msra.mxu0 0
          %526 = vmatprep.mubr.bf16.mxu0 0
          %527 = vmatmul.mubr.bf16.gmra.mrb[0].mxu0 %v492
          %v528 = vpop.f32.mrb[0].mxu0
          %v529 = vadd.f32 %v465, %v528
          %v530 = vpop.f32.mrb[0].mxu0
          %v531 = vpop.f32.mrb[0].mxu0
          %v532 = vadd.f32 %v465, %v531
          %v533 = vpop.f32.mrb[0].mxu0
          %534 = vdwg.mxu0
          %v535 = vsel %vm443, %v529, 0.0
          %536 = vadd.xlane.f32.xlu0 %v535
          %v537 = vpop.xlane.xlu0 %536
          %v538 = vsel %vm443, %v532, 0.0
          %539 = vadd.xlane.f32.xlu0 %v538
          %v540 = vpop.xlane.xlu0 %539
          %v541 = vrcp.pop 64.0
          %v542 = vmul.f32 %v537, %v541
          %v543 = vmul.f32 %v540, %v541
          %v544 = vsub.f32 %v529, %v542
          %v545 = vsub.f32 %v532, %v543
          %v546 = vmul.f32 %v544, %v544
          %v547 = vmul.f32 %v545, %v545
          %v548 = vsel %vm443, %v546, 0.0
          %549 = vadd.xlane.f32.xlu0 %v548
          %v550 = vpop.xlane.xlu0 %549
          %v551 = vsel %vm443, %v547, 0.0
          %552 = vadd.xlane.f32.xlu0 %v551
          %v553 = vpop.xlane.xlu0 %552
          %v554 = vmul.f32 %v550, %v541
          %v555 = vmul.f32 %v553, %v541
          %v556 = vadd.f32 %v554, 1e-05
          %v557 = vadd.f32 %v555, 1e-05
          %v558 = vrsqrt.pop %v556
          %v559 = vrsqrt.pop %v557
          %v560 = vmul.f32 %v544, %v558
          %v561 = vmul.f32 %v545, %v559
          %v562 = vld [vmem:[%s4] sm:$0x1]
          %v564 = vlaneseq
          %v565 = vshrl.u32 %v564, 7
          %v566 = vsub.s32 0, %v565
          %v567 = vrot.slane %v562, %v566
          %v569 = vmul.f32 %v560, %v567
          %v570 = vmul.f32 %v561, %v567
          %v571 = vld [vmem:[%s5] sm:$0x1]
          %v573 = vlaneseq
          %v574 = vshrl.u32 %v573, 7
          %v575 = vsub.s32 0, %v574
          %v576 = vrot.slane %v571, %v575
          %v578 = vadd.f32 %v569, %v576
          %v579 = vadd.f32 %v570, %v576
          %v580 = vmul.f32 %v578, 0.5
          %v581 = vmul.f32 %v579, 0.5
          %v582 = vmul.f32 %v578, 0.70710677
          %v583 = vmul.f32 %v579, 0.70710677
          %v584 = verf.f32.pop %v582
          %v585 = verf.f32.pop %v583
          %v586 = vadd.f32 %v584, 1.0
          %v587 = vadd.f32 %v585, 1.0
          %v588 = vmul.f32 %v580, %v586
          %v589 = vmul.f32 %v581, %v587
          %v590 = vpack.c.bf16 %v589, %v588
          %v591 = vld [vmem:[%s6] sm:$0xf]
          %v592 = vld [vmem:[%s6 + $0x4] sm:$0xf]
          %v593 = vld [vmem:[%s6 + $0x8] sm:$0xf]
          %v594 = vld [vmem:[%s6 + $0xc] sm:$0xf]
          %v595 = vld [vmem:[%s6 + $0x10] sm:$0xf]
          %v596 = vld [vmem:[%s6 + $0x14] sm:$0xf]
          %v597 = vld [vmem:[%s6 + $0x18] sm:$0xf]
          %v598 = vld [vmem:[%s6 + $0x1c] sm:$0xf]
          %v607 = vunpack.c.l.b16 %v591
          %v608 = vunpack.c.l.b16 %v592
          %v609 = vunpack.c.l.b16 %v593
          %v610 = vunpack.c.l.b16 %v594
          %v611 = vunpack.c.l.b16 %v595
          %v612 = vunpack.c.l.b16 %v596
          %v613 = vunpack.c.l.b16 %v597
          %v614 = vunpack.c.l.b16 %v598
          %v615 = vpack.c.b16 %v608, %v607
          %v616 = vpack.c.b16 %v610, %v609
          %v617 = vpack.c.b16 %v612, %v611
          %v618 = vpack.c.b16 %v614, %v613
          %v624 = vsel %vm443, %v590, 0
          %626 = vmatprep.subr.bf16.mxu0 0
          %627 = vmatpush1.bf16.msra.mxu0 %v615
          %628 = vmatprep.subr.bf16.mxu0 0
          %629 = vmatpush1.bf16.msra.mxu0 %v616
          %630 = vmatprep.subr.bf16.mxu0 0
          %631 = vmatpush1.bf16.msra.mxu0 %v617
          %632 = vmatprep.subr.bf16.mxu0 0
          %633 = vmatpush1.bf16.msra.mxu0 %v618
          %634 = vmatprep.subr.bf16.mxu0 0
          %635 = vmatpush1.bf16.msra.mxu0 0
          %636 = vmatprep.subr.bf16.mxu0 0
          %637 = vmatpush1.bf16.msra.mxu0 0
          %638 = vmatprep.subr.bf16.mxu0 0
          %639 = vmatpush1.bf16.msra.mxu0 0
          %640 = vmatprep.subr.bf16.mxu0 0
          %641 = vmatpush1.bf16.msra.mxu0 0
          %642 = vmatprep.subr.bf16.mxu0 0
          %643 = vmatpush1.bf16.msra.mxu0 0
          %644 = vmatprep.subr.bf16.mxu0 0
          %645 = vmatpush1.bf16.msra.mxu0 0
          %646 = vmatprep.subr.bf16.mxu0 0
          %647 = vmatpush1.bf16.msra.mxu0 0
          %648 = vmatprep.subr.bf16.mxu0 0
          %649 = vmatpush1.bf16.msra.mxu0 0
          %650 = vmatprep.subr.bf16.mxu0 0
          %651 = vmatpush1.bf16.msra.mxu0 0
          %652 = vmatprep.subr.bf16.mxu0 0
          %653 = vmatpush1.bf16.msra.mxu0 0
          %654 = vmatprep.subr.bf16.mxu0 0
          %655 = vmatpush1.bf16.msra.mxu0 0
          %656 = vmatprep.subr.bf16.mxu0 0
          %657 = vmatpush1.bf16.msra.mxu0 0
          %658 = vmatprep.mubr.bf16.mxu0 0
          %659 = vmatmul.mubr.bf16.gmra.mrb[0].mxu0 %v624
          %v660 = vpop.f32.mrb[0].mxu0
          %v661 = vadd.f32 0.0, %v660
          %v662 = vpop.f32.mrb[0].mxu0
          %v663 = vpop.f32.mrb[0].mxu0
          %v664 = vadd.f32 0.0, %v663
          %v665 = vpop.f32.mrb[0].mxu0
          %666 = vdwg.mxu0
          %v667 = vpack.c.bf16 %v664, %v661
          %v669 = vunpack.c.l.b16 %v667
          %v670 = vunpack.c.h.b16 %v667
          %v671 = vpack.c.b16 %v669, %v669
          %v672 = vpack.c.b16 %v670, %v670
          %675 = vst [vmem:[%s307] sm:$0xf] %v671
          %676 = vst [vmem:[%s307 + $0x4] sm:$0xf] %v672
        $region56: #{tpu_custom_call.1} parent=47 // pred_fallthru
          _
        %s677 = sand.u32 %s200, 1
        %s678 = scalar_lea.sflag [#allocation4], %s677
        %s679 = sand.u32 %s200, 1
        %s680 = smul.addr %s679, 8
        %s681 = scalar_lea.vmem [#allocation3], %s680
        // Predicated region
        $region57: #{tpu_custom_call.1} parent=47 // pred_check
          %p682 = pneg %p210
        $region58: #{tpu_custom_call.1} parent=47 // pred_check_branch
          %684 = sbr.rel (%p682) target = $region60
        $region59: #{tpu_custom_call.1} parent=47 // pred_region
          %s686 = ssub.s32 128, 128
          %687 = vsyncadd %s678, %s686
          %s688 = smul.addr %s25, 2
          %s689 = smul.addr %s688, 64
          %s690 = scalar_lea.hbm %s7, %s689
          %s691 = sshll.u32 %s681, 4
          %s692 = int_to_ptr.vmem [resolvable:$true] %s691
          %697 = dma.vmem_to_hbm [thread:$0]  %s692, 128, %s690, %s678, 64, 64, 4
        $region60: #{tpu_custom_call.1} parent=47 // pred_fallthru
          _
      $region48: #{tpu_custom_call.1} parent=5 // pred_fallthru
        _
      %p698 = scmp.le.s32.totalorder 2, %s16
      // Predicated region
      $region61: #{tpu_custom_call.1} parent=5 // pred_check
        %p699 = pneg %p698
      $region62: #{tpu_custom_call.1} parent=5 // pred_check_branch
        %701 = sbr.rel (%p699) target = $region64
      $region63: #{tpu_custom_call.1} parent=5 // pred_region
        %s702 = ssub.s32 %s16, 2
        // Predicated region
        $region65: #{tpu_custom_call.1} parent=63 // pred_check
          %p703 = pneg %p216
        $region66: #{tpu_custom_call.1} parent=63 // pred_check_branch
          %705 = sbr.rel (%p703) target = $region68
        $region67: #{tpu_custom_call.1} parent=63 // pred_region
          %s706 = sand.u32 %s201, 1
          %s707 = scalar_lea.sflag [#allocation4], %s706
          %s708 = sand.u32 %s201, 1
          %s709 = smul.addr %s708, 8
          %s710 = scalar_lea.vmem [#allocation3], %s709
          %711 = dma.done %s707, 128
        $region68: #{tpu_custom_call.1} parent=63 // pred_fallthru
          _
      $region64: #{tpu_custom_call.1} parent=5 // pred_fallthru
        _
    $region6: #{tpu_custom_call.1} parent=1 // loop_footer
      %s20 = sadd.s32 1, %s16
    $region7: #{tpu_custom_call.1} parent=1 // loop_footer_branch
      %15 = sbr.rel target = $region3
    $region8: #{tpu_custom_call.1} parent=1 // loop_exit
      _
    %712 = vsyncpa [#allocation4], 1
    %s713 = scalar_lea.sflag [#allocation4], 1
    %714 = vsyncpa %s713, 1

</llo_original>
